<compile_context>
chip_gen: v6e
topology: v6e:2x2x1
jax: 0.10.0
libtpu: 0.0.40
codegen_flags: <defaults>
</compile_context>

<pallas_src>
import functools

import jax
import jax.numpy as jnp
from jax.experimental import pallas as pl
from jax.experimental.pallas import tpu as pltpu


def _round_up(n, m):
    return ((n + m - 1) // m) * m


def mlp4_kernel(x_ref, w1_ref, b1_ref, w2_ref, b2_ref, w3_ref, b3_ref, o_ref):
    # x arrives as f32 and is cast to bf16 in-kernel (VPU), so the wrapper never does a
    # separate pad/cast pass over the activations in HBM.  Weights are bf16 MXU inputs;
    # accumulation, bias add and the sigmoid are f32.
    x = x_ref[...].astype(jnp.bfloat16)

    h1 = jnp.dot(x, w1_ref[...], preferred_element_type=jnp.float32) + b1_ref[...]
    h1 = 0.5 * (jnp.tanh(0.5 * h1) + 1.0)          # sigmoid: single EUP op per element

    h2 = jnp.dot(h1.astype(jnp.bfloat16), w2_ref[...],
                 preferred_element_type=jnp.float32) + b2_ref[...]
    h2 = 0.5 * (jnp.tanh(0.5 * h2) + 1.0)          # sigmoid

    out = jnp.dot(h2.astype(jnp.bfloat16), w3_ref[...],
                  preferred_element_type=jnp.float32) + b3_ref[...]
    o_ref[...] = out.astype(o_ref.dtype)


def mlp4_forward(x_nchw, params, *, bm_max=128, out_dtype=jnp.float32):
    """x_nchw: (B, C, H, W) float32. params are f32 (W:(in,out), b:(1,out)). Returns (B, K).

    out_dtype=jnp.bfloat16 halves the (padded) output writeback if downstream accepts bf16
    logits; the default keeps f32 to match the PyTorch module exactly.
    """
    w1, b1, w2, b2, w3, b3 = params
    B = x_nchw.shape[0]
    D, H1 = w1.shape
    H2 = w2.shape[1]
    K = w3.shape[1]

    # ---- lane padding: hidden/output dims become multiples of 128 (lane-dense stores).
    #      D stays unpadded - it is only the contraction dim and a full-D block is legal. ----
    H1p, H2p, Kp = (_round_up(d, 128) for d in (H1, H2, K))

    # ---- batch tiling: pad-aware bm, and >= 2 grid steps whenever B > 8 so the "parallel"
    #      grid axis can shard across v7x's two TensorCores (harmless on v5e/v6e). ----
    n_tiles = max(2, pl.cdiv(B, bm_max)) if B > 8 else 1
    bm = _round_up(pl.cdiv(B, n_tiles), 8)
    Bp = _round_up(B, bm)
    grid = (Bp // bm,)

    # nn.Flatten(): (B, C, H, W) -> (B, D).  Contiguous reshape => free.  Pad batch only if
    # the tile count requires it (no lane pad, no dtype-cast pass over x in HBM).
    x = x_nchw.reshape(B, D)
    if Bp != B:
        x = jnp.pad(x, ((0, Bp - B), (0, 0)))

    # Zero-padded weights/biases (bf16 weights, f32 biases).  Padded bias lanes MUST stay
    # exactly zero for the padded-lane cancellation argument to hold.
    w1p = jnp.pad(w1, ((0, 0), (0, H1p - H1))).astype(jnp.bfloat16)
    b1p = jnp.pad(b1, ((0, 0), (0, H1p - H1)))
    w2p = jnp.pad(w2, ((0, H1p - H1), (0, H2p - H2))).astype(jnp.bfloat16)
    b2p = jnp.pad(b2, ((0, 0), (0, H2p - H2)))
    w3p = jnp.pad(w3, ((0, H2p - H2), (0, Kp - K))).astype(jnp.bfloat16)
    b3p = jnp.pad(b3, ((0, 0), (0, Kp - K)))

    # ---- VMEM budget: weights/biases are single-buffered residents now; only the x / out
    #      tiles are double-buffered by the pipeline. ----
    weight_bytes = (D * H1p + H1p * H2p + H2p * Kp) * 2           # bf16, single copy
    bias_bytes = (H1p + H2p + Kp) * 4                              # f32
    io_bytes = 2 * bm * D * 4 + 2 * bm * Kp * 4                    # x tile (f32) + out tile
    act_bytes = bm * (H1p + H2p) * 4                               # f32 intermediates
    vmem_need = weight_bytes + bias_bytes + io_bytes + act_bytes

    try:  # generation-aware cap: ~102 MiB on v5e/v6e (128 MiB physical), ~51 MiB on v7x (64 MiB)
        vmem_cap = int(pltpu.get_tpu_info().vmem_capacity_bytes)
    except Exception:  # pragma: no cover - conservative fallback if the query is unavailable
        vmem_cap = 64 * 2**20
    vmem_budget = int(0.8 * vmem_cap)
    if vmem_need > vmem_budget:
        raise ValueError(
            f"MLP4 weights + tiles need ~{vmem_need >> 20} MiB VMEM but only "
            f"{vmem_budget >> 20} MiB is budgeted on this TPU generation; add a reduction "
            "grid axis over D (tile x as (bm, tk), W1 as (tk, H1p) with a f32 accumulator) "
            "instead of keeping W1 fully resident."
        )
    vmem_limit = min(vmem_budget, max(vmem_need + 8 * 2**20, 32 * 2**20))

    cost = pl.CostEstimate(
        flops=2 * Bp * (D * H1p + H1p * H2p + H2p * Kp),
        transcendentals=Bp * (H1p + H2p),                          # one tanh per hidden element
        bytes_accessed=Bp * D * 4 + weight_bytes + bias_bytes + Bp * Kp * jnp.dtype(out_dtype).itemsize,
    )

    # Resident (non-pipelined, single-buffered) VMEM operands for all weights/biases.
    resident = pl.BlockSpec(memory_space=pltpu.MemorySpace.VMEM)

    out = pl.pallas_call(
        mlp4_kernel,
        out_shape=jax.ShapeDtypeStruct((Bp, Kp), out_dtype),
        grid_spec=pltpu.PrefetchScalarGridSpec(
            num_scalar_prefetch=0,
            grid=grid,
            in_specs=[
                pl.BlockSpec((bm, D), lambda i: (i, 0)),   # x tile over batch (full-D block)
                resident,                                   # W1 (bf16)
                resident,                                   # b1 (f32)
                resident,                                   # W2
                resident,                                   # b2
                resident,                                   # W3
                resident,                                   # b3
            ],
            out_specs=pl.BlockSpec((bm, Kp), lambda i: (i, 0)),
        ),
        compiler_params=pltpu.CompilerParams(
            dimension_semantics=("parallel",),
            vmem_limit_bytes=int(vmem_limit),
        ),
        cost_estimate=cost,
    )(x, w1p, b1p, w2p, b2p, w3p, b3p)

    # Slice the lane/batch padding back off.
    return out[:B, :K]


def init_params(key, D, H1, H2, K):
    """Deterministic synthetic init (PyTorch-style uniform fan-in bounds)."""
    ks = jax.random.split(key, 6)

    def lin(kw, kb, fan_in, fan_out):
        bound = 1.0 / jnp.sqrt(fan_in)
        w = jax.random.uniform(kw, (fan_in, fan_out), jnp.float32, -bound, bound)
        b = jax.random.uniform(kb, (1, fan_out), jnp.float32, -bound, bound)
        return w, b

    w1, b1 = lin(ks[0], ks[1], D, H1)
    w2, b2 = lin(ks[2], ks[3], H1, H2)
    w3, b3 = lin(ks[4], ks[5], H2, K)
    return (w1, b1, w2, b2, w3, b3)


def mlp4_reference(x_nchw, params):
    w1, b1, w2, b2, w3, b3 = params
    x = x_nchw.reshape(x_nchw.shape[0], -1)
    h1 = jax.nn.sigmoid(x @ w1 + b1)
    h2 = jax.nn.sigmoid(h1 @ w2 + b2)
    return h2 @ w3 + b3


if __name__ == "__main__":
    # Small shapes consistent with MLP4(D, H1, H2, K) applied to an image-like input.
    B, C, H, W = 16, 4, 4, 4          # input (B, C, H, W); D = C*H*W
    D, H1, H2, K = C * H * W, 32, 16, 8

    key = jax.random.PRNGKey(0)
    k_x, k_p = jax.random.split(key)
    x = jax.random.normal(k_x, (B, C, H, W), jnp.float32)
    params = init_params(k_p, D, H1, H2, K)

    out = mlp4_forward(x, params)
    out = jax.block_until_ready(out)

    ref = mlp4_reference(x, params)
    assert out.shape == (B, K), out.shape
    # bf16 matmul inputs => looser tolerance vs the pure-f32 reference.
    assert jnp.allclose(out, ref, atol=2e-2, rtol=2e-2), "mismatch vs reference"

    print("KERNEL_OK")
</pallas_src>

<mosaic_0001>
module attributes {stable_mosaic.version = 11 : i64} {
  func.func @mlp4_kernel(%arg0: i32, %arg1: memref<8x64xf32, #tpu.memory_space<vmem>>, %arg2: memref<64x128xbf16, #tpu.memory_space<vmem>>, %arg3: memref<1x128xf32, #tpu.memory_space<vmem>>, %arg4: memref<128x128xbf16, #tpu.memory_space<vmem>>, %arg5: memref<1x128xf32, #tpu.memory_space<vmem>>, %arg6: memref<128x128xbf16, #tpu.memory_space<vmem>>, %arg7: memref<1x128xf32, #tpu.memory_space<vmem>>, %arg8: memref<8x128xf32, #tpu.memory_space<vmem>>) attributes {dimension_semantics = [#tpu.dimension_semantics<parallel>], iteration_bounds = array<i64: 2>, scalar_prefetch = 0 : i64, scratch_operands = 0 : i64, tpu.core_type = #tpu.core_type<tc>, window_params = [{transform_indices = @transform_0, window_bounds = array<i64: 8, 64>}, {pipeline_mode = #tpu.pipeline_mode<synchronous>, transform_indices = @transform_1, window_bounds = array<i64: 64, 128>}, {pipeline_mode = #tpu.pipeline_mode<synchronous>, transform_indices = @transform_2, window_bounds = array<i64: 1, 128>}, {pipeline_mode = #tpu.pipeline_mode<synchronous>, transform_indices = @transform_3, window_bounds = array<i64: 128, 128>}, {pipeline_mode = #tpu.pipeline_mode<synchronous>, transform_indices = @transform_4, window_bounds = array<i64: 1, 128>}, {pipeline_mode = #tpu.pipeline_mode<synchronous>, transform_indices = @transform_5, window_bounds = array<i64: 128, 128>}, {pipeline_mode = #tpu.pipeline_mode<synchronous>, transform_indices = @transform_6, window_bounds = array<i64: 1, 128>}, {transform_indices = @transform_7, window_bounds = array<i64: 8, 128>}]} {
    %c0 = arith.constant 0 : index
    %c0_0 = arith.constant 0 : index
    %0 = vector.load %arg1[%c0, %c0_0] : memref<8x64xf32, #tpu.memory_space<vmem>>, vector<8x64xf32>
    %1 = arith.truncf %0 : vector<8x64xf32> to vector<8x64xbf16>
    %c0_1 = arith.constant 0 : index
    %c0_2 = arith.constant 0 : index
    %2 = vector.load %arg2[%c0_1, %c0_2] : memref<64x128xbf16, #tpu.memory_space<vmem>>, vector<64x128xbf16>
    %cst = arith.constant dense<0.000000e+00> : vector<8x128xf32>
    %3 = tpu.matmul %1, %2, %cst {dimension_numbers = #tpu.dot_dimension_numbers<[1], [0], [0], [1], [0, 0, 1, 1], [], []>} : vector<8x64xbf16>, vector<64x128xbf16>, vector<8x128xf32> -> vector<8x128xf32>
    %c0_3 = arith.constant 0 : index
    %c0_4 = arith.constant 0 : index
    %4 = vector.load %arg3[%c0_3, %c0_4] : memref<1x128xf32, #tpu.memory_space<vmem>>, vector<1x128xf32>
    %5 = vector.broadcast %4 : vector<1x128xf32> to vector<8x128xf32>
    %6 = arith.addf %3, %5 : vector<8x128xf32>
    %cst_5 = arith.constant 5.000000e-01 : f32
    %7 = vector.broadcast %cst_5 : f32 to vector<8x128xf32>
    %8 = arith.mulf %7, %6 : vector<8x128xf32>
    %9 = math.tanh %8 : vector<8x128xf32>
    %cst_6 = arith.constant 1.000000e+00 : f32
    %10 = vector.broadcast %cst_6 : f32 to vector<8x128xf32>
    %11 = arith.addf %9, %10 : vector<8x128xf32>
    %cst_7 = arith.constant 5.000000e-01 : f32
    %12 = vector.broadcast %cst_7 : f32 to vector<8x128xf32>
    %13 = arith.mulf %12, %11 : vector<8x128xf32>
    %14 = arith.truncf %13 : vector<8x128xf32> to vector<8x128xbf16>
    %c0_8 = arith.constant 0 : index
    %c0_9 = arith.constant 0 : index
    %15 = vector.load %arg4[%c0_8, %c0_9] : memref<128x128xbf16, #tpu.memory_space<vmem>>, vector<128x128xbf16>
    %cst_10 = arith.constant dense<0.000000e+00> : vector<8x128xf32>
    %16 = tpu.matmul %14, %15, %cst_10 {dimension_numbers = #tpu.dot_dimension_numbers<[1], [0], [0], [1], [0, 0, 1, 1], [], []>} : vector<8x128xbf16>, vector<128x128xbf16>, vector<8x128xf32> -> vector<8x128xf32>
    %c0_11 = arith.constant 0 : index
    %c0_12 = arith.constant 0 : index
    %17 = vector.load %arg5[%c0_11, %c0_12] : memref<1x128xf32, #tpu.memory_space<vmem>>, vector<1x128xf32>
    %18 = vector.broadcast %17 : vector<1x128xf32> to vector<8x128xf32>
    %19 = arith.addf %16, %18 : vector<8x128xf32>
    %cst_13 = arith.constant 5.000000e-01 : f32
    %20 = vector.broadcast %cst_13 : f32 to vector<8x128xf32>
    %21 = arith.mulf %20, %19 : vector<8x128xf32>
    %22 = math.tanh %21 : vector<8x128xf32>
    %cst_14 = arith.constant 1.000000e+00 : f32
    %23 = vector.broadcast %cst_14 : f32 to vector<8x128xf32>
    %24 = arith.addf %22, %23 : vector<8x128xf32>
    %cst_15 = arith.constant 5.000000e-01 : f32
    %25 = vector.broadcast %cst_15 : f32 to vector<8x128xf32>
    %26 = arith.mulf %25, %24 : vector<8x128xf32>
    %27 = arith.truncf %26 : vector<8x128xf32> to vector<8x128xbf16>
    %c0_16 = arith.constant 0 : index
    %c0_17 = arith.constant 0 : index
    %28 = vector.load %arg6[%c0_16, %c0_17] : memref<128x128xbf16, #tpu.memory_space<vmem>>, vector<128x128xbf16>
    %cst_18 = arith.constant dense<0.000000e+00> : vector<8x128xf32>
    %29 = tpu.matmul %27, %28, %cst_18 {dimension_numbers = #tpu.dot_dimension_numbers<[1], [0], [0], [1], [0, 0, 1, 1], [], []>} : vector<8x128xbf16>, vector<128x128xbf16>, vector<8x128xf32> -> vector<8x128xf32>
    %c0_19 = arith.constant 0 : index
    %c0_20 = arith.constant 0 : index
    %30 = vector.load %arg7[%c0_19, %c0_20] : memref<1x128xf32, #tpu.memory_space<vmem>>, vector<1x128xf32>
    %31 = vector.broadcast %30 : vector<1x128xf32> to vector<8x128xf32>
    %32 = arith.addf %29, %31 : vector<8x128xf32>
    %c0_21 = arith.constant 0 : index
    %c0_22 = arith.constant 0 : index
    %33 = vector.load %arg8[%c0_21, %c0_22] : memref<8x128xf32, #tpu.memory_space<vmem>>, vector<8x128xf32>
    tpu.vector_store %arg8[%c0_21, %c0_22], %32 {strides = array<i32>} : memref<8x128xf32, #tpu.memory_space<vmem>>, vector<8x128xf32>,
    return
  }
  func.func @transform_0(%arg0: i32) -> (i32, i32) {
    %c0_i32 = arith.constant 0 : i32
    %c0_i32_0 = arith.constant 0 : i32
    return %arg0, %c0_i32 : i32, i32
  }
  func.func @transform_1(%arg0: i32) -> (i32, i32) {
    %c0_i32 = arith.constant 0 : i32
    %c0_i32_0 = arith.constant 0 : i32
    %c0_i32_1 = arith.constant 0 : i32
    return %c0_i32, %c0_i32_0 : i32, i32
  }
  func.func @transform_2(%arg0: i32) -> (i32, i32) {
    %c0_i32 = arith.constant 0 : i32
    %c0_i32_0 = arith.constant 0 : i32
    %c0_i32_1 = arith.constant 0 : i32
    return %c0_i32, %c0_i32_0 : i32, i32
  }
  func.func @transform_3(%arg0: i32) -> (i32, i32) {
    %c0_i32 = arith.constant 0 : i32
    %c0_i32_0 = arith.constant 0 : i32
    %c0_i32_1 = arith.constant 0 : i32
    return %c0_i32, %c0_i32_0 : i32, i32
  }
  func.func @transform_4(%arg0: i32) -> (i32, i32) {
    %c0_i32 = arith.constant 0 : i32
    %c0_i32_0 = arith.constant 0 : i32
    %c0_i32_1 = arith.constant 0 : i32
    return %c0_i32, %c0_i32_0 : i32, i32
  }
  func.func @transform_5(%arg0: i32) -> (i32, i32) {
    %c0_i32 = arith.constant 0 : i32
    %c0_i32_0 = arith.constant 0 : i32
    %c0_i32_1 = arith.constant 0 : i32
    return %c0_i32, %c0_i32_0 : i32, i32
  }
  func.func @transform_6(%arg0: i32) -> (i32, i32) {
    %c0_i32 = arith.constant 0 : i32
    %c0_i32_0 = arith.constant 0 : i32
    %c0_i32_1 = arith.constant 0 : i32
    return %c0_i32, %c0_i32_0 : i32, i32
  }
  func.func @transform_7(%arg0: i32) -> (i32, i32) {
    %c0_i32 = arith.constant 0 : i32
    %c0_i32_0 = arith.constant 0 : i32
    return %arg0, %c0_i32 : i32, i32
  }
}

</mosaic_0001>

<llo_original>
// kernel: tpu_custom_call.1
$region0: #{tpu_custom_call.1}
  #allocation0 [shape = 'u32[]', space=smem, size = 0x4, offset = 0x4, fixed_abs, tag = 'smem constant byte address 0x4 - core index']
  #allocation1 [shape = 'u32[144,128]{1,0:T(1,128)}', space=vmem, size = 0x12000, scoped, tag = 'internal scratch']
  %s0 = inlined_call_operand.hbm [shape: f32[16,64], index: 0, kind: input, shape index: {}]
  %s1 = inlined_call_operand.hbm [shape: bf16[64,128], index: 1, kind: input, shape index: {}]
  %s2 = inlined_call_operand.vmem [shape: f32[1,128], index: 2, kind: input, shape index: {}]
  %s3 = inlined_call_operand.hbm [shape: bf16[128,128], index: 3, kind: input, shape index: {}]
  %s4 = inlined_call_operand.vmem [shape: f32[1,128], index: 4, kind: input, shape index: {}]
  %s5 = inlined_call_operand.hbm [shape: bf16[128,128], index: 5, kind: input, shape index: {}]
  %s6 = inlined_call_operand.vmem [shape: f32[1,128], index: 6, kind: input, shape index: {}]
  %s7 = inlined_call_operand.hbm [shape: f32[16,128], index: 7, kind: output, shape index: {}]
  %s8 = sld [smem:[#allocation0]]
  $region77: #{tpu_custom_call.1} parent=0
    _
  %s10 = ssub.s32 1, %s8
  %s11 = scalar_select 0, %s10, %s8
  $region1: #{tpu_custom_call.1} parent=0
    #allocation2 [shape = 'u8[8192]{0}', space=vmem, size = 0x2000, scoped, tag = 'input window, operand 0']
    #allocation3 [shape = 's32[2]{0}', space=sflag, size = 0x8, scoped, tag = 'scoped memory for tpu_custom_call.1']
    #allocation4 [shape = 's32[2]{0}', space=sflag, size = 0x8, scoped, tag = 'scoped memory for tpu_custom_call.1']
    #allocation5 [shape = 'u8[16384]{0}', space=vmem, size = 0x4000, scoped, tag = 'input window, operand 1, single buffered']
    #allocation6 [shape = 's32[1]{0}', space=sflag, size = 0x4, scoped, tag = 'scoped memory for tpu_custom_call.1']
    #allocation7 [shape = 'u8[32768]{0}', space=vmem, size = 0x8000, scoped, tag = 'input window, operand 3, single buffered']
    #allocation8 [shape = 'u8[32768]{0}', space=vmem, size = 0x8000, scoped, tag = 'input window, operand 5, single buffered']
    #allocation9 [shape = 's32[1]{0}', space=sflag, size = 0x4, scoped, tag = 'scoped memory for tpu_custom_call.1']
    #allocation10 [shape = 'u8[8192]{0}', space=vmem, size = 0x2000, scoped, tag = 'output window, operand 0']
    %12 = vsyncpa [#allocation3], 0
    %s13 = scalar_lea.sflag [#allocation3], 1
    %14 = vsyncpa %s13, 0
    %15 = vsyncpa [#allocation6], 0
    %16 = vsyncpa [#allocation9], 0
    %17 = vsyncpa [#allocation4], 0
    %s18 = scalar_lea.sflag [#allocation4], 1
    %19 = vsyncpa %s18, 0
    loop: start=0, step=1, limit=4
    $region2: #{tpu_custom_call.1} parent=1 // loop_pre_header
      _
    $region3: #{tpu_custom_call.1} parent=1 // loop_header
      %s21 = sphi 0, %s25
      %p22 = scmp.ge.s32.totalorder %s21, 4
      %s31 = sphi 0, %s33
      %s34 = sphi 0, %s31
      %s35 = sphi 0, %s34
      %s51 = sphi 0, %s35
      %s55 = sphi 0, %s55
      %s57 = sphi 0, %s55
      %s58 = sphi 0, %s57
      %s72 = sphi 0, %s58
      %s76 = sphi 0, %s76
      %s78 = sphi 0, %s76
      %s79 = sphi 0, %s78
      %s93 = sphi 0, %s79
      %s97 = sphi 0, %s97
      %s99 = sphi 0, %s97
      %s100 = sphi 0, %s99
      %s114 = sphi 0, %s100
      %s118 = sphi 0, %s118
      %s120 = sphi 0, %s118
      %s121 = sphi 0, %s120
      %s135 = sphi 0, %s121
      %s139 = sphi 0, %s139
      %s141 = sphi 0, %s139
      %s142 = sphi 0, %s141
      %s156 = sphi 0, %s142
      %s160 = sphi 0, %s160
      %s162 = sphi 0, %s160
      %s163 = sphi 0, %s162
      %s177 = sphi 0, %s163
      %s183 = sphi 0, %s185
      %s186 = sphi 0, %s183
      %s187 = sphi 0, %s186
      %s203 = sphi 0, %s187
    $region4: #{tpu_custom_call.1} parent=1 // loop_header_branch
      %24 = sbr.rel (%p22) target = $region8
    $region5: #{tpu_custom_call.1} parent=1 // loop_body
      %s26 = ssub.s32 %s21, 1
      %s27 = ssub.s32 %s21, 2
      %s28 = sadd.s32 %s21, 1
      %s29 = ssub.s32 %s21, %s28
      %p30 = scmp.eq.s32.totalorder %s29, 0
      %s32 = sadd.s32 %s31, 1
      %s33 = scalar_select %p30, %s31, %s32
      %p36 = pneg %p30
      %p37 = scmp.eq.s32.totalorder %s21, 1
      %p38 = por %p36, %p37
      %p39 = scmp.ne.s32.totalorder %s31, %s34
      %p40 = scmp.eq.s32.totalorder %s21, 0
      %p41 = por %p39, %p40
      %p42 = scmp.ne.s32.totalorder %s31, %s34
      %p43 = scmp.eq.s32.totalorder %s26, 1
      %p44 = por %p42, %p43
      %p45 = scmp.ne.s32.totalorder %s34, %s35
      %p46 = scmp.eq.s32.totalorder %s26, 0
      %p47 = por %p45, %p46
      %p48 = scmp.ne.s32.totalorder %s34, %s35
      %p49 = scmp.eq.s32.totalorder %s27, 1
      %p50 = por %p48, %p49
      %p52 = scmp.ne.s32.totalorder %s35, %s51
      %p53 = scmp.eq.s32.totalorder %s27, 0
      %p54 = por %p52, %p53
      %s56 = sadd.s32 %s55, 1
      %p59 = scmp.eq.s32.totalorder %s21, 1
      %p60 = scmp.ne.s32.totalorder %s55, %s57
      %p61 = scmp.eq.s32.totalorder %s21, 0
      %p62 = por %p60, %p61
      %p63 = scmp.ne.s32.totalorder %s55, %s57
      %p64 = scmp.eq.s32.totalorder %s26, 1
      %p65 = por %p63, %p64
      %p66 = scmp.ne.s32.totalorder %s57, %s58
      %p67 = scmp.eq.s32.totalorder %s26, 0
      %p68 = por %p66, %p67
      %p69 = scmp.ne.s32.totalorder %s57, %s58
      %p70 = scmp.eq.s32.totalorder %s27, 1
      %p71 = por %p69, %p70
      %p73 = scmp.ne.s32.totalorder %s58, %s72
      %p74 = scmp.eq.s32.totalorder %s27, 0
      %p75 = por %p73, %p74
      %s77 = sadd.s32 %s76, 1
      %p80 = scmp.eq.s32.totalorder %s21, 1
      %p81 = scmp.ne.s32.totalorder %s76, %s78
      %p82 = scmp.eq.s32.totalorder %s21, 0
      %p83 = por %p81, %p82
      %p84 = scmp.ne.s32.totalorder %s76, %s78
      %p85 = scmp.eq.s32.totalorder %s26, 1
      %p86 = por %p84, %p85
      %p87 = scmp.ne.s32.totalorder %s78, %s79
      %p88 = scmp.eq.s32.totalorder %s26, 0
      %p89 = por %p87, %p88
      %p90 = scmp.ne.s32.totalorder %s78, %s79
      %p91 = scmp.eq.s32.totalorder %s27, 1
      %p92 = por %p90, %p91
      %p94 = scmp.ne.s32.totalorder %s79, %s93
      %p95 = scmp.eq.s32.totalorder %s27, 0
      %p96 = por %p94, %p95
      %s98 = sadd.s32 %s97, 1
      %p101 = scmp.eq.s32.totalorder %s21, 1
      %p102 = scmp.ne.s32.totalorder %s97, %s99
      %p103 = scmp.eq.s32.totalorder %s21, 0
      %p104 = por %p102, %p103
      %p105 = scmp.ne.s32.totalorder %s97, %s99
      %p106 = scmp.eq.s32.totalorder %s26, 1
      %p107 = por %p105, %p106
      %p108 = scmp.ne.s32.totalorder %s99, %s100
      %p109 = scmp.eq.s32.totalorder %s26, 0
      %p110 = por %p108, %p109
      %p111 = scmp.ne.s32.totalorder %s99, %s100
      %p112 = scmp.eq.s32.totalorder %s27, 1
      %p113 = por %p111, %p112
      %p115 = scmp.ne.s32.totalorder %s100, %s114
      %p116 = scmp.eq.s32.totalorder %s27, 0
      %p117 = por %p115, %p116
      %s119 = sadd.s32 %s118, 1
      %p122 = scmp.eq.s32.totalorder %s21, 1
      %p123 = scmp.ne.s32.totalorder %s118, %s120
      %p124 = scmp.eq.s32.totalorder %s21, 0
      %p125 = por %p123, %p124
      %p126 = scmp.ne.s32.totalorder %s118, %s120
      %p127 = scmp.eq.s32.totalorder %s26, 1
      %p128 = por %p126, %p127
      %p129 = scmp.ne.s32.totalorder %s120, %s121
      %p130 = scmp.eq.s32.totalorder %s26, 0
      %p131 = por %p129, %p130
      %p132 = scmp.ne.s32.totalorder %s120, %s121
      %p133 = scmp.eq.s32.totalorder %s27, 1
      %p134 = por %p132, %p133
      %p136 = scmp.ne.s32.totalorder %s121, %s135
      %p137 = scmp.eq.s32.totalorder %s27, 0
      %p138 = por %p136, %p137
      %s140 = sadd.s32 %s139, 1
      %p143 = scmp.eq.s32.totalorder %s21, 1
      %p144 = scmp.ne.s32.totalorder %s139, %s141
      %p145 = scmp.eq.s32.totalorder %s21, 0
      %p146 = por %p144, %p145
      %p147 = scmp.ne.s32.totalorder %s139, %s141
      %p148 = scmp.eq.s32.totalorder %s26, 1
      %p149 = por %p147, %p148
      %p150 = scmp.ne.s32.totalorder %s141, %s142
      %p151 = scmp.eq.s32.totalorder %s26, 0
      %p152 = por %p150, %p151
      %p153 = scmp.ne.s32.totalorder %s141, %s142
      %p154 = scmp.eq.s32.totalorder %s27, 1
      %p155 = por %p153, %p154
      %p157 = scmp.ne.s32.totalorder %s142, %s156
      %p158 = scmp.eq.s32.totalorder %s27, 0
      %p159 = por %p157, %p158
      %s161 = sadd.s32 %s160, 1
      %p164 = scmp.eq.s32.totalorder %s21, 1
      %p165 = scmp.ne.s32.totalorder %s160, %s162
      %p166 = scmp.eq.s32.totalorder %s21, 0
      %p167 = por %p165, %p166
      %p168 = scmp.ne.s32.totalorder %s160, %s162
      %p169 = scmp.eq.s32.totalorder %s26, 1
      %p170 = por %p168, %p169
      %p171 = scmp.ne.s32.totalorder %s162, %s163
      %p172 = scmp.eq.s32.totalorder %s26, 0
      %p173 = por %p171, %p172
      %p174 = scmp.ne.s32.totalorder %s162, %s163
      %p175 = scmp.eq.s32.totalorder %s27, 1
      %p176 = por %p174, %p175
      %p178 = scmp.ne.s32.totalorder %s163, %s177
      %p179 = scmp.eq.s32.totalorder %s27, 0
      %p180 = por %p178, %p179
      %s181 = ssub.s32 %s21, %s28
      %p182 = scmp.eq.s32.totalorder %s181, 0
      %s184 = sadd.s32 %s183, 1
      %s185 = scalar_select %p182, %s183, %s184
      %p188 = pneg %p182
      %p189 = scmp.eq.s32.totalorder %s21, 1
      %p190 = por %p188, %p189
      %p191 = scmp.ne.s32.totalorder %s183, %s186
      %p192 = scmp.eq.s32.totalorder %s21, 0
      %p193 = por %p191, %p192
      %p194 = scmp.ne.s32.totalorder %s183, %s186
      %p195 = scmp.eq.s32.totalorder %s26, 1
      %p196 = por %p194, %p195
      %p197 = scmp.ne.s32.totalorder %s186, %s187
      %p198 = scmp.eq.s32.totalorder %s26, 0
      %p199 = por %p197, %p198
      %p200 = scmp.ne.s32.totalorder %s186, %s187
      %p201 = scmp.eq.s32.totalorder %s27, 1
      %p202 = por %p200, %p201
      %p204 = scmp.ne.s32.totalorder %s187, %s203
      %p205 = scmp.eq.s32.totalorder %s27, 0
      %p206 = por %p204, %p205
      %p207 = scmp.le.s32.totalorder 1, %s21
      %p208 = scmp.lt.s32.totalorder %s21, 3
      %p209 = pnand %p207, %p208
      %p210 = pneg %p209
      // Predicated region
      $region9: #{tpu_custom_call.1} parent=5 // pred_check
        _
      $region10: #{tpu_custom_call.1} parent=5 // pred_check_branch
        %212 = sbr.rel (%p209) target = $region12
      $region11: #{tpu_custom_call.1} parent=5 // pred_region
        %s213 = ssub.s32 %s21, 1
        // Predicated region
        $region13: #{tpu_custom_call.1} parent=11 // pred_check
          %p214 = pneg %p68
        $region14: #{tpu_custom_call.1} parent=11 // pred_check_branch
          %216 = sbr.rel (%p214) target = $region16
        $region15: #{tpu_custom_call.1} parent=11 // pred_region
          %s218 = ssub.s32 512, 512
          %219 = vsyncadd [#allocation6], %s218
          %s220 = sshll.u32 [#allocation5], 4
          %s221 = int_to_ptr.vmem [resolvable:$true] %s220
          %226 = dma.hbm_to_vmem [thread:$0]  %s1, 512, %s221, [#allocation6], 64, 64, 4
        $region16: #{tpu_custom_call.1} parent=11 // pred_fallthru
          _
        // Predicated region
        $region17: #{tpu_custom_call.1} parent=11 // pred_check
          %p227 = pneg %p89
        $region18: #{tpu_custom_call.1} parent=11 // pred_check_branch
          %229 = sbr.rel (%p227) target = $region20
        $region19: #{tpu_custom_call.1} parent=11 // pred_region
          _
        $region20: #{tpu_custom_call.1} parent=11 // pred_fallthru
          _
        // Predicated region
        $region21: #{tpu_custom_call.1} parent=11 // pred_check
          %p230 = pneg %p110
        $region22: #{tpu_custom_call.1} parent=11 // pred_check_branch
          %232 = sbr.rel (%p230) target = $region24
        $region23: #{tpu_custom_call.1} parent=11 // pred_region
          %s234 = ssub.s32 1024, 1024
          %235 = vsyncadd [#allocation6], %s234
          %s236 = sshll.u32 [#allocation7], 4
          %s237 = int_to_ptr.vmem [resolvable:$true] %s236
          %242 = dma.hbm_to_vmem [thread:$0]  %s3, 1024, %s237, [#allocation6], 64, 64, 4
        $region24: #{tpu_custom_call.1} parent=11 // pred_fallthru
          _
        // Predicated region
        $region25: #{tpu_custom_call.1} parent=11 // pred_check
          %p243 = pneg %p131
        $region26: #{tpu_custom_call.1} parent=11 // pred_check_branch
          %245 = sbr.rel (%p243) target = $region28
        $region27: #{tpu_custom_call.1} parent=11 // pred_region
          _
        $region28: #{tpu_custom_call.1} parent=11 // pred_fallthru
          _
        // Predicated region
        $region29: #{tpu_custom_call.1} parent=11 // pred_check
          %p246 = pneg %p152
        $region30: #{tpu_custom_call.1} parent=11 // pred_check_branch
          %248 = sbr.rel (%p246) target = $region32
        $region31: #{tpu_custom_call.1} parent=11 // pred_region
          %s250 = ssub.s32 1024, 1024
          %251 = vsyncadd [#allocation9], %s250
          %s252 = sshll.u32 [#allocation8], 4
          %s253 = int_to_ptr.vmem [resolvable:$true] %s252
          %258 = dma.hbm_to_vmem [thread:$0]  %s5, 1024, %s253, [#allocation9], 64, 64, 4
        $region32: #{tpu_custom_call.1} parent=11 // pred_fallthru
          _
        // Predicated region
        $region33: #{tpu_custom_call.1} parent=11 // pred_check
          %p259 = pneg %p173
        $region34: #{tpu_custom_call.1} parent=11 // pred_check_branch
          %261 = sbr.rel (%p259) target = $region36
        $region35: #{tpu_custom_call.1} parent=11 // pred_region
          _
        $region36: #{tpu_custom_call.1} parent=11 // pred_fallthru
          _
      $region12: #{tpu_custom_call.1} parent=5 // pred_fallthru
        _
      %p262 = scmp.lt.s32.totalorder %s21, 2
      // Predicated region
      $region37: #{tpu_custom_call.1} parent=5 // pred_check
        %p263 = pneg %p262
      $region38: #{tpu_custom_call.1} parent=5 // pred_check_branch
        %265 = sbr.rel (%p263) target = $region40
      $region39: #{tpu_custom_call.1} parent=5 // pred_region
        // Predicated region
        $region41: #{tpu_custom_call.1} parent=39 // pred_check
          %p266 = pneg %p41
        $region42: #{tpu_custom_call.1} parent=39 // pred_check_branch
          %268 = sbr.rel (%p266) target = $region44
        $region43: #{tpu_custom_call.1} parent=39 // pred_region
          %s269 = sand.u32 %s31, 1
          %s270 = scalar_lea.sflag [#allocation3], %s269
          %s271 = sand.u32 %s31, 1
          %s272 = smul.addr %s271, 8
          %s273 = scalar_lea.vmem [#allocation2], %s272
          %s275 = ssub.s32 128, 128
          %276 = vsyncadd %s270, %s275
          %s277 = smul.addr %s21, 128
          %s278 = scalar_lea.hbm %s0, %s277
          %s280 = sshll.u32 %s273, 4
          %s281 = int_to_ptr.vmem [resolvable:$true] %s280
          %283 = dma.hbm_to_vmem [thread:$0]  %s278, 128, %s281, %s270
        $region44: #{tpu_custom_call.1} parent=39 // pred_fallthru
          _
      $region40: #{tpu_custom_call.1} parent=5 // pred_fallthru
        _
      %p284 = scmp.le.s32.totalorder 1, %s21
      %p285 = scmp.lt.s32.totalorder %s21, 3
      %p286 = pnand %p284, %p285
      %p287 = pneg %p286
      // Predicated region
      $region45: #{tpu_custom_call.1} parent=5 // pred_check
        _
      $region46: #{tpu_custom_call.1} parent=5 // pred_check_branch
        %289 = sbr.rel (%p286) target = $region48
      $region47: #{tpu_custom_call.1} parent=5 // pred_region
        %s290 = ssub.s32 %s21, 1
        %s291 = sand.u32 %s34, 1
        %s292 = scalar_lea.sflag [#allocation3], %s291
        %s293 = sand.u32 %s34, 1
        %s294 = smul.addr %s293, 8
        %s295 = scalar_lea.vmem [#allocation2], %s294
        // Predicated region
        $region49: #{tpu_custom_call.1} parent=47 // pred_check
          %p296 = pneg %p47
        $region50: #{tpu_custom_call.1} parent=47 // pred_check_branch
          %298 = sbr.rel (%p296) target = $region52
        $region51: #{tpu_custom_call.1} parent=47 // pred_region
          %299 = dma.done %s292, 128
        $region52: #{tpu_custom_call.1} parent=47 // pred_fallthru
          _
        // Predicated region
        $region53: #{tpu_custom_call.1} parent=47 // pred_check
          %p300 = pneg %p68
        $region54: #{tpu_custom_call.1} parent=47 // pred_check_branch
          %302 = sbr.rel (%p300) target = $region56
        $region55: #{tpu_custom_call.1} parent=47 // pred_region
          %303 = dma.done [#allocation6], 512
        $region56: #{tpu_custom_call.1} parent=47 // pred_fallthru
          _
        // Predicated region
        $region57: #{tpu_custom_call.1} parent=47 // pred_check
          %p304 = pneg %p110
        $region58: #{tpu_custom_call.1} parent=47 // pred_check_branch
          %306 = sbr.rel (%p304) target = $region60
        $region59: #{tpu_custom_call.1} parent=47 // pred_region
          %307 = dma.done [#allocation6], 1024
        $region60: #{tpu_custom_call.1} parent=47 // pred_fallthru
          _
        // Predicated region
        $region61: #{tpu_custom_call.1} parent=47 // pred_check
          %p308 = pneg %p152
        $region62: #{tpu_custom_call.1} parent=47 // pred_check_branch
          %310 = sbr.rel (%p308) target = $region64
        $region63: #{tpu_custom_call.1} parent=47 // pred_region
          %311 = dma.done [#allocation9], 1024
        $region64: #{tpu_custom_call.1} parent=47 // pred_fallthru
          _
        %s312 = sand.u32 %s34, 1
        %s313 = scalar_lea.sflag [#allocation3], %s312
        %s314 = sand.u32 %s34, 1
        %s315 = smul.addr %s314, 8
        %s316 = scalar_lea.vmem [#allocation2], %s315
        %p317 = pneg %p47
        %p318 = pneg %p44
        %p319 = pneg %p68
        %p320 = pneg %p65
        %p321 = pneg %p89
        %p322 = pneg %p86
        %p323 = pneg %p110
        %p324 = pneg %p107
        %p325 = pneg %p131
        %p326 = pneg %p128
        %p327 = pneg %p152
        %p328 = pneg %p149
        %p329 = pneg %p173
        %p330 = pneg %p170
        %p331 = pneg %p199
        %p332 = pneg %p196
        %s333 = sand.u32 %s186, 1
        %s334 = scalar_lea.sflag [#allocation4], %s333
        %s335 = sand.u32 %s186, 1
        %s336 = smul.addr %s335, 8
        %s337 = scalar_lea.vmem [#allocation10], %s336
        %v339 = vld [vmem:[%s295] sm:$0xff]
        %v340 = vpack.c.bf16 %v339, %v339
        %v341 = vld [vmem:[#allocation5] sm:$0xf]
        %v342 = vld [vmem:[#allocation5 + $0x4] sm:$0xf]
        %v343 = vld [vmem:[#allocation5 + $0x8] sm:$0xf]
        %v344 = vld [vmem:[#allocation5 + $0xc] sm:$0xf]
        %v345 = vld [vmem:[#allocation5 + $0x10] sm:$0xf]
        %v346 = vld [vmem:[#allocation5 + $0x14] sm:$0xf]
        %v347 = vld [vmem:[#allocation5 + $0x18] sm:$0xf]
        %v348 = vld [vmem:[#allocation5 + $0x1c] sm:$0xf]
        %v349 = vld [vmem:[%s2] sm:$0x1]
        %v351 = vlaneseq
        %v352 = vshrl.u32 %v351, 7
        %v353 = vsub.s32 0, %v352
        %v354 = vrot.slane %v349, %v353
        %v364 = vunpack.c.l.b16 %v341
        %v365 = vunpack.c.l.b16 %v342
        %v366 = vunpack.c.l.b16 %v343
        %v367 = vunpack.c.l.b16 %v344
        %v368 = vunpack.c.l.b16 %v345
        %v369 = vunpack.c.l.b16 %v346
        %v370 = vunpack.c.l.b16 %v347
        %v371 = vunpack.c.l.b16 %v348
        %v372 = vpack.c.b16 %v365, %v364
        %v373 = vpack.c.b16 %v367, %v366
        %v374 = vpack.c.b16 %v369, %v368
        %v375 = vpack.c.b16 %v371, %v370
        %vm380 = vcmask 523264
        %v382 = vsel %vm380, %v340, 0
        %384 = vmatprep.subr.bf16.mxu0 0
        %385 = vmatpush1.bf16.msra.mxu0 0
        %386 = vmatprep.subr.bf16.mxu0 0
        %387 = vmatpush1.bf16.msra.mxu0 0
        %388 = vmatprep.subr.bf16.mxu0 0
        %389 = vmatpush1.bf16.msra.mxu0 0
        %390 = vmatprep.subr.bf16.mxu0 0
        %391 = vmatpush1.bf16.msra.mxu0 0
        %392 = vmatprep.subr.bf16.mxu0 0
        %393 = vmatpush1.bf16.msra.mxu0 %v375
        %394 = vmatprep.subr.bf16.mxu0 0
        %395 = vmatpush1.bf16.msra.mxu0 %v374
        %396 = vmatprep.subr.bf16.mxu0 0
        %397 = vmatpush1.bf16.msra.mxu0 %v373
        %398 = vmatprep.subr.bf16.mxu0 0
        %399 = vmatpush1.bf16.msra.mxu0 %v372
        %400 = vmatprep.subr.bf16.mxu0 0
        %401 = vmatpush2.bf16.msra.mxu0 0
        %402 = vmatprep.subr.bf16.mxu0 0
        %403 = vmatpush2.bf16.msra.mxu0 0
        %404 = vmatprep.subr.bf16.mxu0 0
        %405 = vmatpush2.bf16.msra.mxu0 0
        %406 = vmatprep.subr.bf16.mxu0 0
        %407 = vmatpush2.bf16.msra.mxu0 0
        %408 = vmatprep.subr.bf16.mxu0 0
        %409 = vmatpush2.bf16.msra.mxu0 0
        %410 = vmatprep.subr.bf16.mxu0 0
        %411 = vmatpush2.bf16.msra.mxu0 0
        %412 = vmatprep.subr.bf16.mxu0 0
        %413 = vmatpush2.bf16.msra.mxu0 0
        %414 = vmatprep.subr.bf16.mxu0 0
        %415 = vmatpush2.bf16.msra.mxu0 0
        %416 = vmatprep.mubr.bf16.mxu0 0
        %417 = vmatmul.mubr.bf16.gmra.mxu0 %v382
        %v418 = vpop.f32.mrf.mxu0
        %v419 = vadd.f32 %v354, %v418
        %v420 = vpop.f32.mrf.mxu0
        %v421 = vpop.f32.mrf.mxu0
        %v422 = vpop.f32.mrf.mxu0
        %423 = vdwg.mxu0
        %v424 = vmul.f32 %v419, 0.5
        %v425 = vtanh.pop %v424
        %v426 = vadd.f32 %v425, 1.0
        %v427 = vmul.f32 %v426, 0.5
        %v428 = vpack.c.bf16 %v427, %v427
        %v429 = vld [vmem:[#allocation7] sm:$0xf]
        %v430 = vld [vmem:[#allocation7 + $0x4] sm:$0xf]
        %v431 = vld [vmem:[#allocation7 + $0x8] sm:$0xf]
        %v432 = vld [vmem:[#allocation7 + $0xc] sm:$0xf]
        %v433 = vld [vmem:[#allocation7 + $0x10] sm:$0xf]
        %v434 = vld [vmem:[#allocation7 + $0x14] sm:$0xf]
        %v435 = vld [vmem:[#allocation7 + $0x18] sm:$0xf]
        %v436 = vld [vmem:[#allocation7 + $0x1c] sm:$0xf]
        %v437 = vld [vmem:[#allocation7 + $0x20] sm:$0xf]
        %v438 = vld [vmem:[#allocation7 + $0x24] sm:$0xf]
        %v439 = vld [vmem:[#allocation7 + $0x28] sm:$0xf]
        %v440 = vld [vmem:[#allocation7 + $0x2c] sm:$0xf]
        %v441 = vld [vmem:[#allocation7 + $0x30] sm:$0xf]
        %v442 = vld [vmem:[#allocation7 + $0x34] sm:$0xf]
        %v443 = vld [vmem:[#allocation7 + $0x38] sm:$0xf]
        %v444 = vld [vmem:[#allocation7 + $0x3c] sm:$0xf]
        %v445 = vld [vmem:[%s4] sm:$0x1]
        %v447 = vlaneseq
        %v448 = vshrl.u32 %v447, 7
        %v449 = vsub.s32 0, %v448
        %v450 = vrot.slane %v445, %v449
        %v468 = vunpack.c.l.b16 %v429
        %v469 = vunpack.c.l.b16 %v430
        %v470 = vunpack.c.l.b16 %v431
        %v471 = vunpack.c.l.b16 %v432
        %v472 = vunpack.c.l.b16 %v433
        %v473 = vunpack.c.l.b16 %v434
        %v474 = vunpack.c.l.b16 %v435
        %v475 = vunpack.c.l.b16 %v436
        %v476 = vunpack.c.l.b16 %v437
        %v477 = vunpack.c.l.b16 %v438
        %v478 = vunpack.c.l.b16 %v439
        %v479 = vunpack.c.l.b16 %v440
        %v480 = vunpack.c.l.b16 %v441
        %v481 = vunpack.c.l.b16 %v442
        %v482 = vunpack.c.l.b16 %v443
        %v483 = vunpack.c.l.b16 %v444
        %v484 = vpack.c.b16 %v469, %v468
        %v485 = vpack.c.b16 %v471, %v470
        %v486 = vpack.c.b16 %v473, %v472
        %v487 = vpack.c.b16 %v475, %v474
        %v488 = vpack.c.b16 %v477, %v476
        %v489 = vpack.c.b16 %v479, %v478
        %v490 = vpack.c.b16 %v481, %v480
        %v491 = vpack.c.b16 %v483, %v482
        %500 = vmatprep.subr.bf16.mxu0 0
        %501 = vmatpush1.bf16.msra.mxu0 %v491
        %502 = vmatprep.subr.bf16.mxu0 0
        %503 = vmatpush1.bf16.msra.mxu0 %v490
        %504 = vmatprep.subr.bf16.mxu0 0
        %505 = vmatpush1.bf16.msra.mxu0 %v489
        %506 = vmatprep.subr.bf16.mxu0 0
        %507 = vmatpush1.bf16.msra.mxu0 %v488
        %508 = vmatprep.subr.bf16.mxu0 0
        %509 = vmatpush1.bf16.msra.mxu0 %v487
        %510 = vmatprep.subr.bf16.mxu0 0
        %511 = vmatpush1.bf16.msra.mxu0 %v486
        %512 = vmatprep.subr.bf16.mxu0 0
        %513 = vmatpush1.bf16.msra.mxu0 %v485
        %514 = vmatprep.subr.bf16.mxu0 0
        %515 = vmatpush1.bf16.msra.mxu0 %v484
        %516 = vmatprep.subr.bf16.mxu0 0
        %517 = vmatpush2.bf16.msra.mxu0 0
        %518 = vmatprep.subr.bf16.mxu0 0
        %519 = vmatpush2.bf16.msra.mxu0 0
        %520 = vmatprep.subr.bf16.mxu0 0
        %521 = vmatpush2.bf16.msra.mxu0 0
        %522 = vmatprep.subr.bf16.mxu0 0
        %523 = vmatpush2.bf16.msra.mxu0 0
        %524 = vmatprep.subr.bf16.mxu0 0
        %525 = vmatpush2.bf16.msra.mxu0 0
        %526 = vmatprep.subr.bf16.mxu0 0
        %527 = vmatpush2.bf16.msra.mxu0 0
        %528 = vmatprep.subr.bf16.mxu0 0
        %529 = vmatpush2.bf16.msra.mxu0 0
        %530 = vmatprep.subr.bf16.mxu0 0
        %531 = vmatpush2.bf16.msra.mxu0 0
        %532 = vmatprep.mubr.bf16.mxu0 0
        %533 = vmatmul.mubr.bf16.gmra.mxu0 %v428
        %v534 = vpop.f32.mrf.mxu0
        %v535 = vadd.f32 %v450, %v534
        %v536 = vpop.f32.mrf.mxu0
        %v537 = vpop.f32.mrf.mxu0
        %v538 = vpop.f32.mrf.mxu0
        %539 = vdwg.mxu0
        %v540 = vmul.f32 %v535, 0.5
        %v541 = vtanh.pop %v540
        %v542 = vadd.f32 %v541, 1.0
        %v543 = vmul.f32 %v542, 0.5
        %v544 = vpack.c.bf16 %v543, %v543
        %v545 = vld [vmem:[#allocation8] sm:$0xf]
        %v546 = vld [vmem:[#allocation8 + $0x4] sm:$0xf]
        %v547 = vld [vmem:[#allocation8 + $0x8] sm:$0xf]
        %v548 = vld [vmem:[#allocation8 + $0xc] sm:$0xf]
        %v549 = vld [vmem:[#allocation8 + $0x10] sm:$0xf]
        %v550 = vld [vmem:[#allocation8 + $0x14] sm:$0xf]
        %v551 = vld [vmem:[#allocation8 + $0x18] sm:$0xf]
        %v552 = vld [vmem:[#allocation8 + $0x1c] sm:$0xf]
        %v553 = vld [vmem:[#allocation8 + $0x20] sm:$0xf]
        %v554 = vld [vmem:[#allocation8 + $0x24] sm:$0xf]
        %v555 = vld [vmem:[#allocation8 + $0x28] sm:$0xf]
        %v556 = vld [vmem:[#allocation8 + $0x2c] sm:$0xf]
        %v557 = vld [vmem:[#allocation8 + $0x30] sm:$0xf]
        %v558 = vld [vmem:[#allocation8 + $0x34] sm:$0xf]
        %v559 = vld [vmem:[#allocation8 + $0x38] sm:$0xf]
        %v560 = vld [vmem:[#allocation8 + $0x3c] sm:$0xf]
        %v561 = vld [vmem:[%s6] sm:$0x1]
        %v563 = vlaneseq
        %v564 = vshrl.u32 %v563, 7
        %v565 = vsub.s32 0, %v564
        %v566 = vrot.slane %v561, %v565
        %v584 = vunpack.c.l.b16 %v545
        %v585 = vunpack.c.l.b16 %v546
        %v586 = vunpack.c.l.b16 %v547
        %v587 = vunpack.c.l.b16 %v548
        %v588 = vunpack.c.l.b16 %v549
        %v589 = vunpack.c.l.b16 %v550
        %v590 = vunpack.c.l.b16 %v551
        %v591 = vunpack.c.l.b16 %v552
        %v592 = vunpack.c.l.b16 %v553
        %v593 = vunpack.c.l.b16 %v554
        %v594 = vunpack.c.l.b16 %v555
        %v595 = vunpack.c.l.b16 %v556
        %v596 = vunpack.c.l.b16 %v557
        %v597 = vunpack.c.l.b16 %v558
        %v598 = vunpack.c.l.b16 %v559
        %v599 = vunpack.c.l.b16 %v560
        %v600 = vpack.c.b16 %v585, %v584
        %v601 = vpack.c.b16 %v587, %v586
        %v602 = vpack.c.b16 %v589, %v588
        %v603 = vpack.c.b16 %v591, %v590
        %v604 = vpack.c.b16 %v593, %v592
        %v605 = vpack.c.b16 %v595, %v594
        %v606 = vpack.c.b16 %v597, %v596
        %v607 = vpack.c.b16 %v599, %v598
        %616 = vmatprep.subr.bf16.mxu0 0
        %617 = vmatpush1.bf16.msra.mxu0 %v607
        %618 = vmatprep.subr.bf16.mxu0 0
        %619 = vmatpush1.bf16.msra.mxu0 %v606
        %620 = vmatprep.subr.bf16.mxu0 0
        %621 = vmatpush1.bf16.msra.mxu0 %v605
        %622 = vmatprep.subr.bf16.mxu0 0
        %623 = vmatpush1.bf16.msra.mxu0 %v604
        %624 = vmatprep.subr.bf16.mxu0 0
        %625 = vmatpush1.bf16.msra.mxu0 %v603
        %626 = vmatprep.subr.bf16.mxu0 0
        %627 = vmatpush1.bf16.msra.mxu0 %v602
        %628 = vmatprep.subr.bf16.mxu0 0
        %629 = vmatpush1.bf16.msra.mxu0 %v601
        %630 = vmatprep.subr.bf16.mxu0 0
        %631 = vmatpush1.bf16.msra.mxu0 %v600
        %632 = vmatprep.subr.bf16.mxu0 0
        %633 = vmatpush2.bf16.msra.mxu0 0
        %634 = vmatprep.subr.bf16.mxu0 0
        %635 = vmatpush2.bf16.msra.mxu0 0
        %636 = vmatprep.subr.bf16.mxu0 0
        %637 = vmatpush2.bf16.msra.mxu0 0
        %638 = vmatprep.subr.bf16.mxu0 0
        %639 = vmatpush2.bf16.msra.mxu0 0
        %640 = vmatprep.subr.bf16.mxu0 0
        %641 = vmatpush2.bf16.msra.mxu0 0
        %642 = vmatprep.subr.bf16.mxu0 0
        %643 = vmatpush2.bf16.msra.mxu0 0
        %644 = vmatprep.subr.bf16.mxu0 0
        %645 = vmatpush2.bf16.msra.mxu0 0
        %646 = vmatprep.subr.bf16.mxu0 0
        %647 = vmatpush2.bf16.msra.mxu0 0
        %648 = vmatprep.mubr.bf16.mxu0 0
        %649 = vmatmul.mubr.bf16.gmra.mxu0 %v544
        %v650 = vpop.f32.mrf.mxu0
        %v651 = vadd.f32 %v566, %v650
        %v652 = vpop.f32.mrf.mxu0
        %v653 = vpop.f32.mrf.mxu0
        %v654 = vpop.f32.mrf.mxu0
        %655 = vdwg.mxu0
        %656 = vst [vmem:[%s337] sm:$0xff] %v651
        %s657 = sand.u32 %s186, 1
        %s658 = scalar_lea.sflag [#allocation4], %s657
        %s659 = sand.u32 %s186, 1
        %s660 = smul.addr %s659, 8
        %s661 = scalar_lea.vmem [#allocation10], %s660
        // Predicated region
        $region65: #{tpu_custom_call.1} parent=47 // pred_check
          %p662 = pneg %p196
        $region66: #{tpu_custom_call.1} parent=47 // pred_check_branch
          %664 = sbr.rel (%p662) target = $region68
        $region67: #{tpu_custom_call.1} parent=47 // pred_region
          %s666 = ssub.s32 128, 128
          %667 = vsyncadd %s658, %s666
          %s668 = smul.addr %s26, 128
          %s669 = scalar_lea.hbm %s7, %s668
          %s671 = sshll.u32 %s661, 4
          %s672 = int_to_ptr.vmem [resolvable:$true] %s671
          %674 = dma.vmem_to_hbm [thread:$0]  %s672, 128, %s669, %s658
        $region68: #{tpu_custom_call.1} parent=47 // pred_fallthru
          _
      $region48: #{tpu_custom_call.1} parent=5 // pred_fallthru
        _
      %p675 = scmp.le.s32.totalorder 2, %s21
      // Predicated region
      $region69: #{tpu_custom_call.1} parent=5 // pred_check
        %p676 = pneg %p675
      $region70: #{tpu_custom_call.1} parent=5 // pred_check_branch
        %678 = sbr.rel (%p676) target = $region72
      $region71: #{tpu_custom_call.1} parent=5 // pred_region
        %s679 = ssub.s32 %s21, 2
        // Predicated region
        $region73: #{tpu_custom_call.1} parent=71 // pred_check
          %p680 = pneg %p202
        $region74: #{tpu_custom_call.1} parent=71 // pred_check_branch
          %682 = sbr.rel (%p680) target = $region76
        $region75: #{tpu_custom_call.1} parent=71 // pred_region
          %s683 = sand.u32 %s187, 1
          %s684 = scalar_lea.sflag [#allocation4], %s683
          %s685 = sand.u32 %s187, 1
          %s686 = smul.addr %s685, 8
          %s687 = scalar_lea.vmem [#allocation10], %s686
          %688 = dma.done %s684, 128
        $region76: #{tpu_custom_call.1} parent=71 // pred_fallthru
          _
      $region72: #{tpu_custom_call.1} parent=5 // pred_fallthru
        _
    $region6: #{tpu_custom_call.1} parent=1 // loop_footer
      %s25 = sadd.s32 1, %s21
    $region7: #{tpu_custom_call.1} parent=1 // loop_footer_branch
      %20 = sbr.rel target = $region3
    $region8: #{tpu_custom_call.1} parent=1 // loop_exit
      _
    %689 = vsyncpa [#allocation3], 1
    %s690 = scalar_lea.sflag [#allocation3], 1
    %691 = vsyncpa %s690, 1
    %692 = vsyncpa [#allocation6], 1
    %693 = vsyncpa [#allocation9], 1
    %694 = vsyncpa [#allocation4], 1
    %s695 = scalar_lea.sflag [#allocation4], 1
    %696 = vsyncpa %s695, 1

</llo_original>
